<compile_context>
chip_gen: v5e
topology: v5e:2x2
jax: 0.10.0
libtpu: 0.0.40
codegen_flags: <defaults>
</compile_context>

<pallas_src>
import functools
import math

import numpy as np
import jax
import jax.numpy as jnp
from jax.experimental import pallas as pl
from jax.experimental.pallas import tpu as pltpu

NEG_SLOPE = 0.01  # torch.nn.LeakyReLU default negative_slope


def _activation(t, active_fun):
    if active_fun == "relu":
        return jnp.maximum(t, 0.0)
    if active_fun == "none":
        return t
    return jnp.where(t >= 0, t, NEG_SLOPE * t)  # LeakyReLU(0.01)


def _round_up(x, m):
    return (x + m - 1) // m * m


def _cdiv(a, b):
    return (a + b - 1) // b


def _vmem_limit_bytes():
    """~80% of physical VMEM per core (leaves compiler-scratch headroom)."""
    try:
        cap = getattr(pltpu.get_tpu_info(), "vmem_capacity_bytes", None)
        if cap:
            return int(cap * 0.8)
    except Exception:
        pass
    return 64 * 1024 * 1024


def _resolve_tiles(N, tm, tk):
    """Round tiles to multiples of 128 and clamp so >=2 row tiles exist
    (megacore sharding on v7x); returns (tm, tk, n_i, n_k, nrp, nkp)."""
    tm = _round_up(max(int(tm), 128), 128)
    tk = _round_up(max(int(tk), 128), 128)
    half = max(128, _round_up(_round_up(N, 128) // 2, 128))
    tm = min(tm, half)
    tk = min(tk, _round_up(N, 128))
    n_i = _cdiv(N, tm)
    n_k = _cdiv(N, tk)
    return tm, tk, n_i, n_k, n_i * tm, n_k * tk


def _collapse_relations(norm_A, active_fun, use_weight):
    # Linear special case: no nonlinearity & no per-relation weight means the
    # relation sum commutes with the matmul -> stream (sum_r A_r) once.
    if active_fun == "none" and not use_weight:
        return jnp.sum(norm_A, axis=0, keepdims=True)
    return norm_A


def build_block_meta(norm_A, tm, tk):
    """Per (row-tile, relation): nonzero k-tile indices + counts.

    Built once per graph (the adjacency is static across layers / steps).
    Padding entries repeat the last valid index so the pipelined A DMA is
    elided for masked tail steps.
    """
    R, N, _ = norm_A.shape
    n_i, n_k = _cdiv(N, tm), _cdiv(N, tk)
    nz = (norm_A != 0)
    nz = jnp.pad(nz, ((0, 0), (0, n_i * tm - N), (0, n_k * tk - N)))
    blk = nz.reshape(R, n_i, tm, n_k, tk).any(axis=(2, 4))   # (R, n_i, n_k)
    blk = np.asarray(jax.device_get(blk))

    max_kt = max(1, int(blk.sum(axis=2).max()))
    kidx = np.zeros((n_i, R, max_kt), np.int32)
    cnt = np.zeros((n_i, R), np.int32)
    for i in range(n_i):
        for r in range(R):
            idxs = np.nonzero(blk[r, i])[0].astype(np.int32)
            c = idxs.size
            cnt[i, r] = c
            if c:
                kidx[i, r, :c] = idxs
                kidx[i, r, c:] = idxs[-1]
    return (jnp.asarray(kidx.reshape(-1)), jnp.asarray(cnt.reshape(-1)), max_kt)


def _rgcn_kernel(kidx_ref, cnt_ref, a_ref, x_ref, *rest, active_fun,
                 use_weight, x_resident, tk, R, max_kt):
    """Grid = (row_tiles, R, max_k_tiles); r and k are reduction axes.

    kidx_ref/cnt_ref : SMEM scalar-prefetch block-sparsity tables.
    a_ref  : (1, TM, TK) nonzero tile of A_r (column picked by the table)
    x_ref  : (1, NKP, Hp) resident E  OR  (1, TK, Hp) streamed E tile
    w_ref  : (1, Hp, Hp)  per-relation weight (use_weight=True only)
    o_ref  : (TM, Hp)     output row tile, VMEM-resident across (r, k)
    acc_ref: (TM, Hp) f32 K-partial accumulator for the current relation
    """
    if use_weight:
        w_ref, o_ref, acc_ref = rest
    else:
        o_ref, acc_ref = rest

    i = pl.program_id(0)
    r = pl.program_id(1)
    k = pl.program_id(2)

    @pl.when(jnp.logical_and(r == 0, k == 0))
    def _():
        o_ref[...] = jnp.zeros_like(o_ref)

    @pl.when(k == 0)
    def _():
        acc_ref[...] = jnp.zeros_like(acc_ref)

    cnt = cnt_ref[i * R + r]

    @pl.when(k < cnt)  # skip masked tail steps of sparser (row-tile, relation)s
    def _():
        if x_resident:
            kt = kidx_ref[(i * R + r) * max_kt + k]
            off = pl.multiple_of(kt * tk, tk)
            x_blk = x_ref[0, pl.ds(off, tk), :]
        else:
            x_blk = x_ref[0]
        acc_ref[...] += jnp.dot(a_ref[0], x_blk,
                                preferred_element_type=jnp.float32)

    @pl.when(k == pl.num_programs(2) - 1)
    def _():
        t = acc_ref[...]
        if use_weight:
            # (A_r @ E) @ W_r, then activation — same order as the PyTorch ref.
            t = jnp.dot(t, w_ref[0], preferred_element_type=jnp.float32)
        o_ref[...] += _activation(t, active_fun).astype(o_ref.dtype)


def relational_graph_conv(norm_A, embs, w=None, *, active_fun="leaky_relu",
                          use_weight=False, compute_dtype=jnp.bfloat16,
                          tm=512, tk=2048, block_meta=None, collapsed=False):
    """Pallas implementation of RelationalGraphConvLayer.forward (use_rgcn=True).

    norm_A: (R, N, N) dense row-normalized adjacency (densified CSR).
    embs  : (N, H) node embeddings.
    w     : (R, H, H) per-relation weights (only used when use_weight=True).
    Zero padding (when needed) is semantically inert because f(0) == 0 for
    relu / leaky_relu / identity.
    """
    if not collapsed:
        norm_A = _collapse_relations(norm_A, active_fun, use_weight)
    R, N, _ = norm_A.shape
    H = embs.shape[1]
    hp = _round_up(H, 128)                       # lane-dense output
    tm, tk, n_i, n_k, nrp, nkp = _resolve_tiles(N, tm, tk)

    if block_meta is None:
        block_meta = build_block_meta(norm_A, tm, tk)
    kidx, cnt, max_kt = block_meta

    # A stream: cast / pad only if actually needed (no full zero-slab rebuild).
    a = norm_A if norm_A.dtype == compute_dtype else norm_A.astype(compute_dtype)
    if nrp != N or nkp != N:
        a = jnp.pad(a, ((0, 0), (0, nrp - N), (0, nkp - N)))

    x = embs if embs.dtype == compute_dtype else embs.astype(compute_dtype)
    if nkp != N or hp != H:
        x = jnp.pad(x, ((0, nkp - N), (0, hp - H)))
    x = x[None]                                   # (1, nkp, hp)

    # VMEM budget: prefer a fully resident E slab (single load).
    itemsize = jnp.dtype(compute_dtype).itemsize
    vmem_limit = _vmem_limit_bytes()
    resident_bytes = (2 * tm * tk * itemsize      # A double buffer
                      + 2 * nkp * hp * itemsize   # resident E
                      + 2 * tm * hp * 4           # output double buffer
                      + tm * hp * 4               # accumulator scratch
                      + (2 * hp * hp * 4 if use_weight else 0))
    x_resident = resident_bytes <= int(0.7 * vmem_limit)

    operands = [a, x]
    in_specs = [
        pl.BlockSpec((1, tm, tk),
                     lambda i, r, k, kidx_ref, cnt_ref:
                         (r, i, kidx_ref[(i * R + r) * max_kt + k])),
    ]
    if x_resident:
        in_specs.append(pl.BlockSpec(
            (1, nkp, hp), lambda i, r, k, kidx_ref, cnt_ref: (0, 0, 0)))
    else:
        in_specs.append(pl.BlockSpec(
            (1, tk, hp),
            lambda i, r, k, kidx_ref, cnt_ref:
                (0, kidx_ref[(i * R + r) * max_kt + k], 0)))

    if use_weight:
        wq = w if w.dtype == jnp.float32 else w.astype(jnp.float32)
        if hp != H:
            wq = jnp.pad(wq, ((0, 0), (0, hp - H), (0, hp - H)))
        operands.append(wq)
        in_specs.append(pl.BlockSpec(
            (1, hp, hp), lambda i, r, k, kidx_ref, cnt_ref: (r, 0, 0)))

    out = pl.pallas_call(
        functools.partial(_rgcn_kernel, active_fun=active_fun,
                          use_weight=use_weight, x_resident=x_resident,
                          tk=tk, R=R, max_kt=max_kt),
        out_shape=jax.ShapeDtypeStruct((nrp, hp), jnp.float32),
        grid_spec=pltpu.PrefetchScalarGridSpec(
            num_scalar_prefetch=2,
            grid=(n_i, R, max_kt),
            in_specs=in_specs,
            out_specs=pl.BlockSpec(
                (tm, hp), lambda i, r, k, kidx_ref, cnt_ref: (i, 0)),
            scratch_shapes=[pltpu.VMEM((tm, hp), jnp.float32)],
        ),
        compiler_params=pltpu.CompilerParams(
            # row tiles independent (megacore-shardable); relation / K axes
            # are serial reductions with data-dependent block indices.
            dimension_semantics=("parallel", "arbitrary", "arbitrary"),
            vmem_limit_bytes=vmem_limit,
        ),
    )(kidx, cnt, *operands)

    return out[:N, :H]


def relational_graph_conv_model(norm_A, init_embs, w_list=None, *,
                                num_layer=2, active_fun="leaky_relu",
                                use_weight=False, use_residual=False,
                                compute_dtype=jnp.bfloat16, tm=512, tk=2048):
    """RelationalGraphConvModel.forward (use_layer_weight=False path): the
    graph part of PredictNet.forward — stacked RGCN layers + optional residual.
    The block-sparsity table and the A dtype cast are hoisted out of the layer
    loop (the adjacency is static across layers)."""
    norm_A = _collapse_relations(norm_A, active_fun, use_weight)
    N = norm_A.shape[1]
    tm_r, tk_r, *_ = _resolve_tiles(N, tm, tk)
    meta = build_block_meta(norm_A, tm_r, tk_r)
    if norm_A.dtype != compute_dtype:
        norm_A = norm_A.astype(compute_dtype)

    embs = init_embs
    one_embs = None
    for i in range(num_layer):
        wi = None if w_list is None else w_list[i]
        embs = relational_graph_conv(norm_A, embs, wi, active_fun=active_fun,
                                     use_weight=use_weight,
                                     compute_dtype=compute_dtype,
                                     tm=tm, tk=tk, block_meta=meta,
                                     collapsed=True)
        if i == 0 and use_residual:
            one_embs = embs
        if i > 0 and use_residual:
            embs = embs + one_embs
    return embs


# ----------------------------- pure-JAX references -----------------------------

def _layer_reference(norm_A, embs, w, *, active_fun, use_weight):
    out = None
    for r in range(norm_A.shape[0]):
        t = norm_A[r] @ embs
        if use_weight:
            t = t @ w[r]
        if active_fun != "none":
            t = _activation(t, active_fun)
        out = t if out is None else out + t
    return out


def _model_reference(norm_A, init_embs, w_list, *, num_layer, active_fun,
                     use_weight, use_residual):
    embs = init_embs
    one_embs = None
    for i in range(num_layer):
        wi = None if w_list is None else w_list[i]
        embs = _layer_reference(norm_A, embs, wi, active_fun=active_fun,
                                use_weight=use_weight)
        if i == 0 and use_residual:
            one_embs = embs
        if i > 0 and use_residual:
            embs = embs + one_embs
    return embs


if __name__ == "__main__":
    # Small deterministic problem: R relations, N nodes (non-multiple of the
    # tile to exercise padding), hidden dim H.
    R, N, H = 3, 200, 32
    TM, TK = 128, 128  # small tiles so the test exercises row/K tiling

    key = jax.random.PRNGKey(0)
    k_a, k_e, k_w = jax.random.split(key, 3)

    # Dense "normalized" adjacency per relation (stand-in for csr2tensor).
    raw = jax.random.uniform(k_a, (R, N, N), dtype=jnp.float32)
    adj = jnp.where(raw > 0.8, raw, 0.0) + jnp.eye(N, dtype=jnp.float32)[None]
    # Relation 2 only has edges into the first 64 columns -> its second k-tile
    # is all zero, exercising the block-sparse skip / masked tail steps.
    col_mask = (jnp.arange(N) < 64).astype(jnp.float32)[None, :]
    adj = adj.at[2].set((jnp.where(raw[2] > 0.8, raw[2], 0.0) + 0.01) * col_mask)
    norm_A = adj / jnp.sum(adj, axis=-1, keepdims=True)

    embs = jax.random.normal(k_e, (N, H), dtype=jnp.float32)

    # Parameter self.w: (num_rel, hidden_dim, hidden_dim), xavier-style init.
    fan_in, fan_out = H * H, R * H
    bound = math.sqrt(6.0 / (fan_in + fan_out))
    w = jax.random.uniform(k_w, (R, H, H), dtype=jnp.float32,
                           minval=-bound, maxval=bound)

    # 1) use_weight=False, leaky_relu, f32 compute, small tiles.
    out_nw = relational_graph_conv(norm_A, embs, active_fun="leaky_relu",
                                   use_weight=False,
                                   compute_dtype=jnp.float32, tm=TM, tk=TK)
    jax.block_until_ready(out_nw)
    ref_nw = _layer_reference(norm_A, embs, w, active_fun="leaky_relu",
                              use_weight=False)
    assert jnp.allclose(out_nw, ref_nw, atol=1e-4, rtol=1e-4)

    # 2) use_weight=True (W_r fused into the kernel, no E@W materialization).
    out_w = relational_graph_conv(norm_A, embs, w, active_fun="leaky_relu",
                                  use_weight=True,
                                  compute_dtype=jnp.float32, tm=TM, tk=TK)
    jax.block_until_ready(out_w)
    ref_w = _layer_reference(norm_A, embs, w, active_fun="leaky_relu",
                             use_weight=True)
    assert jnp.allclose(out_w, ref_w, atol=1e-4, rtol=1e-3)

    # 3) Default config: bf16 A/E stream, large default tiles (auto-clamped).
    out_bf16 = relational_graph_conv(norm_A, embs, active_fun="leaky_relu",
                                     use_weight=False)
    jax.block_until_ready(out_bf16)
    assert jnp.allclose(out_bf16, ref_nw, atol=5e-2, rtol=5e-2)

    # 4) Linear special case (active_fun='none', no weight): collapsed A-sum.
    out_lin = relational_graph_conv(norm_A, embs, active_fun="none",
                                    use_weight=False,
                                    compute_dtype=jnp.float32, tm=TM, tk=TK)
    jax.block_until_ready(out_lin)
    ref_lin = _layer_reference(norm_A, embs, w, active_fun="none",
                               use_weight=False)
    assert jnp.allclose(out_lin, ref_lin, atol=1e-4, rtol=1e-4)

    # 5) Divisible N: zero-copy pass-through of A (no padding copy), relu.
    N2 = 256
    raw2 = jax.random.uniform(jax.random.PRNGKey(1), (R, N2, N2),
                              dtype=jnp.float32)
    adj2 = jnp.where(raw2 > 0.9, raw2, 0.0) + jnp.eye(N2, dtype=jnp.float32)[None]
    norm_A2 = adj2 / jnp.sum(adj2, axis=-1, keepdims=True)
    embs2 = jax.random.normal(jax.random.PRNGKey(2), (N2, H), dtype=jnp.float32)
    out2 = relational_graph_conv(norm_A2, embs2, active_fun="relu",
                                 use_weight=False,
                                 compute_dtype=jnp.float32, tm=TM, tk=TK)
    jax.block_until_ready(out2)
    ref2 = _layer_reference(norm_A2, embs2, w, active_fun="relu",
                            use_weight=False)
    assert jnp.allclose(out2, ref2, atol=1e-4, rtol=1e-4)

    # 6) Two stacked layers = RelationalGraphConvModel / PredictNet.forward
    #    (use_residual=False, use_layer_weight=False defaults).
    out_model = relational_graph_conv_model(norm_A, embs, num_layer=2,
                                            active_fun="leaky_relu",
                                            use_weight=False,
                                            compute_dtype=jnp.float32,
                                            tm=TM, tk=TK)
    jax.block_until_ready(out_model)
    ref_model = _model_reference(norm_A, embs, None, num_layer=2,
                                 active_fun="leaky_relu", use_weight=False,
                                 use_residual=False)
    assert jnp.allclose(out_model, ref_model, atol=1e-4, rtol=1e-4)

    print("KERNEL_OK")
</pallas_src>

<mosaic_0001>
module attributes {stable_mosaic.version = 11 : i64} {
  func.func @_rgcn_kernel(%arg0: i32, %arg1: i32, %arg2: i32, %arg3: memref<12xi32, #tpu.memory_space<smem>>, %arg4: memref<6xi32, #tpu.memory_space<smem>>, %arg5: memref<1x128x128xf32, #tpu.memory_space<vmem>>, %arg6: memref<1x256x128xf32, #tpu.memory_space<vmem>>, %arg7: memref<128x128xf32, #tpu.memory_space<vmem>>, %arg8: memref<128x128xf32, #tpu.memory_space<vmem>>) attributes {dimension_semantics = [#tpu.dimension_semantics<parallel>, #tpu.dimension_semantics<arbitrary>, #tpu.dimension_semantics<arbitrary>], iteration_bounds = array<i64: 2, 3, 2>, scalar_prefetch = 2 : i64, scratch_operands = 1 : i64, tpu.core_type = #tpu.core_type<tc>, window_params = [{transform_indices = @transform_0, window_bounds = array<i64: 1, 128, 128>}, {pipeline_mode = #tpu.pipeline_mode<synchronous>, transform_indices = @transform_1, window_bounds = array<i64: 1, 256, 128>}, {transform_indices = @transform_2, window_bounds = array<i64: 128, 128>}]} {
    %c0_i32 = arith.constant 0 : i32
    %0 = arith.cmpi eq, %arg1, %c0_i32 : i32
    %c0_i32_0 = arith.constant 0 : i32
    %1 = arith.cmpi eq, %arg2, %c0_i32_0 : i32
    %2 = arith.andi %0, %1 : i1
    %3 = arith.extui %2 : i1 to i32
    %c0_i32_1 = arith.constant 0 : i32
    %4 = arith.cmpi ne, %3, %c0_i32_1 : i32
    scf.if %4 {
      %cst = arith.constant 0.000000e+00 : f32
      %18 = vector.broadcast %cst : f32 to vector<128x128xf32>
      %c0 = arith.constant 0 : index
      %c0_6 = arith.constant 0 : index
      %19 = vector.load %arg7[%c0, %c0_6] : memref<128x128xf32, #tpu.memory_space<vmem>>, vector<128x128xf32>
      tpu.vector_store %arg7[%c0, %c0_6], %18 {strides = array<i32>} : memref<128x128xf32, #tpu.memory_space<vmem>>, vector<128x128xf32>,
    } else {
    }
    %c0_i32_2 = arith.constant 0 : i32
    %5 = arith.cmpi eq, %arg2, %c0_i32_2 : i32
    %6 = arith.extui %5 : i1 to i32
    %c0_i32_3 = arith.constant 0 : i32
    %7 = arith.cmpi ne, %6, %c0_i32_3 : i32
    scf.if %7 {
      %cst = arith.constant 0.000000e+00 : f32
      %18 = vector.broadcast %cst : f32 to vector<128x128xf32>
      %c0 = arith.constant 0 : index
      %c0_6 = arith.constant 0 : index
      %19 = vector.load %arg8[%c0, %c0_6] : memref<128x128xf32, #tpu.memory_space<vmem>>, vector<128x128xf32>
      tpu.vector_store %arg8[%c0, %c0_6], %18 {strides = array<i32>} : memref<128x128xf32, #tpu.memory_space<vmem>>, vector<128x128xf32>,
    } else {
    }
    %c3_i32 = arith.constant 3 : i32
    %8 = arith.muli %arg0, %c3_i32 : i32
    %9 = arith.addi %8, %arg1 : i32
    %10 = arith.index_cast %9 : i32 to index
    %11 = memref.load %arg4[%10] : memref<6xi32, #tpu.memory_space<smem>>
    %12 = arith.cmpi slt, %arg2, %11 : i32
    %13 = arith.extui %12 : i1 to i32
    %c0_i32_4 = arith.constant 0 : i32
    %14 = arith.cmpi ne, %13, %c0_i32_4 : i32
    scf.if %14 {
      %c3_i32_6 = arith.constant 3 : i32
      %18 = arith.muli %arg0, %c3_i32_6 : i32
      %19 = arith.addi %18, %arg1 : i32
      %c2_i32 = arith.constant 2 : i32
      %20 = arith.muli %19, %c2_i32 : i32
      %21 = arith.addi %20, %arg2 : i32
      %22 = arith.index_cast %21 : i32 to index
      %23 = memref.load %arg3[%22] : memref<12xi32, #tpu.memory_space<smem>>
      %c128_i32 = arith.constant 128 : i32
      %24 = arith.muli %23, %c128_i32 : i32
      %25 = tpu.assume_multiple %24, 128 : i32
      %c0 = arith.constant 0 : index
      %26 = arith.index_cast %25 : i32 to index
      %c0_7 = arith.constant 0 : index
      %27 = vector.load %arg6[%c0, %26, %c0_7] : memref<1x256x128xf32, #tpu.memory_space<vmem>>, vector<1x128x128xf32>
      %28 = vector.shape_cast %27 : vector<1x128x128xf32> to vector<128x128xf32>
      %c0_8 = arith.constant 0 : index
      %c0_9 = arith.constant 0 : index
      %29 = vector.load %arg8[%c0_8, %c0_9] : memref<128x128xf32, #tpu.memory_space<vmem>>, vector<128x128xf32>
      %c0_10 = arith.constant 0 : index
      %c0_11 = arith.constant 0 : index
      %c0_12 = arith.constant 0 : index
      %30 = vector.load %arg5[%c0_10, %c0_11, %c0_12] : memref<1x128x128xf32, #tpu.memory_space<vmem>>, vector<1x128x128xf32>
      %31 = vector.shape_cast %30 : vector<1x128x128xf32> to vector<128x128xf32>
      %cst = arith.constant dense<0.000000e+00> : vector<128x128xf32>
      %32 = tpu.matmul %31, %28, %cst {dimension_numbers = #tpu.dot_dimension_numbers<[1], [0], [0], [1], [0, 0, 1, 1], [], []>} : vector<128x128xf32>, vector<128x128xf32>, vector<128x128xf32> -> vector<128x128xf32>
      %33 = arith.addf %29, %32 : vector<128x128xf32>
      %c0_13 = arith.constant 0 : index
      %c0_14 = arith.constant 0 : index
      %34 = vector.load %arg8[%c0_13, %c0_14] : memref<128x128xf32, #tpu.memory_space<vmem>>, vector<128x128xf32>
      tpu.vector_store %arg8[%c0_13, %c0_14], %33 {strides = array<i32>} : memref<128x128xf32, #tpu.memory_space<vmem>>, vector<128x128xf32>,
    } else {
    }
    %c1_i32 = arith.constant 1 : i32
    %15 = arith.cmpi eq, %arg2, %c1_i32 : i32
    %16 = arith.extui %15 : i1 to i32
    %c0_i32_5 = arith.constant 0 : i32
    %17 = arith.cmpi ne, %16, %c0_i32_5 : i32
    scf.if %17 {
      %c0 = arith.constant 0 : index
      %c0_6 = arith.constant 0 : index
      %18 = vector.load %arg8[%c0, %c0_6] : memref<128x128xf32, #tpu.memory_space<vmem>>, vector<128x128xf32>
      %c0_7 = arith.constant 0 : index
      %c0_8 = arith.constant 0 : index
      %19 = vector.load %arg7[%c0_7, %c0_8] : memref<128x128xf32, #tpu.memory_space<vmem>>, vector<128x128xf32>
      %cst = arith.constant 0.000000e+00 : f32
      %20 = vector.broadcast %cst : f32 to vector<128x128xf32>
      %21 = arith.cmpf oge, %18, %20 : vector<128x128xf32>
      %cst_9 = arith.constant 0.00999999977 : f32
      %22 = vector.broadcast %cst_9 : f32 to vector<128x128xf32>
      %23 = arith.mulf %22, %18 : vector<128x128xf32>
      %24 = arith.select %21, %18, %23 : vector<128x128xi1>, vector<128x128xf32>
      %25 = arith.addf %19, %24 : vector<128x128xf32>
      %c0_10 = arith.constant 0 : index
      %c0_11 = arith.constant 0 : index
      %26 = vector.load %arg7[%c0_10, %c0_11] : memref<128x128xf32, #tpu.memory_space<vmem>>, vector<128x128xf32>
      tpu.vector_store %arg7[%c0_10, %c0_11], %25 {strides = array<i32>} : memref<128x128xf32, #tpu.memory_space<vmem>>, vector<128x128xf32>,
    } else {
    }
    return
  }
  func.func @transform_0(%arg0: i32, %arg1: i32, %arg2: i32, %arg3: memref<12xi32, #tpu.memory_space<smem>>, %arg4: memref<6xi32, #tpu.memory_space<smem>>) -> (i32, i32, i32) {
    %c3_i32 = arith.constant 3 : i32
    %0 = arith.muli %arg0, %c3_i32 : i32
    %1 = arith.addi %0, %arg1 : i32
    %c2_i32 = arith.constant 2 : i32
    %2 = arith.muli %1, %c2_i32 : i32
    %3 = arith.addi %2, %arg2 : i32
    %4 = arith.index_cast %3 : i32 to index
    %5 = memref.load %arg3[%4] : memref<12xi32, #tpu.memory_space<smem>>
    %c0_i32 = arith.constant 0 : i32
    return %arg1, %arg0, %5 : i32, i32, i32
  }
  func.func @transform_1(%arg0: i32, %arg1: i32, %arg2: i32, %arg3: memref<12xi32, #tpu.memory_space<smem>>, %arg4: memref<6xi32, #tpu.memory_space<smem>>) -> (i32, i32, i32) {
    %c0_i32 = arith.constant 0 : i32
    %c0_i32_0 = arith.constant 0 : i32
    %c0_i32_1 = arith.constant 0 : i32
    %c0_i32_2 = arith.constant 0 : i32
    return %c0_i32, %c0_i32_0, %c0_i32_1 : i32, i32, i32
  }
  func.func @transform_2(%arg0: i32, %arg1: i32, %arg2: i32, %arg3: memref<12xi32, #tpu.memory_space<smem>>, %arg4: memref<6xi32, #tpu.memory_space<smem>>) -> (i32, i32) {
    %c0_i32 = arith.constant 0 : i32
    %c0_i32_0 = arith.constant 0 : i32
    return %arg0, %c0_i32 : i32, i32
  }
}

</mosaic_0001>

<llo_original>
// kernel: tpu_custom_call.1
$region0: #{tpu_custom_call.1}
  #allocation0 [shape = 'u32[]', space=smem, size = 0x4, offset = 0x4, fixed_abs, tag = 'smem constant byte address 0x4 - core index']
  #allocation1 [shape = 'u32[72,128]{1,0:T(1,128)}', space=vmem, size = 0x9000, scoped, tag = 'internal scratch']
  #allocation2 [shape = 'f32[128,128]{1,0:T(8,128)}', space=vmem, size = 0x10000, scoped, tag = 'scratch operand']
  #allocation3 [shape = 's32[1]{0}', space=sflag, size = 0x4, scoped, tag = 'scoped memory for tpu_custom_call.1']
  #allocation4 [shape = 'u8[512]{0}', space=smem, size = 0x200, scoped, tag = 'prefetched SMEM operand 0']
  #allocation5 [shape = 'u8[512]{0}', space=smem, size = 0x200, scoped, tag = 'prefetched SMEM operand 1']
  %s0 = inlined_call_operand.hbm [shape: s32[12], index: 0, kind: input, shape index: {}]
  %s1 = inlined_call_operand.hbm [shape: s32[6], index: 1, kind: input, shape index: {}]
  %s2 = inlined_call_operand.hbm [shape: f32[3,256,256], index: 2, kind: input, shape index: {}]
  %s3 = inlined_call_operand.hbm [shape: f32[1,256,128], index: 3, kind: input, shape index: {}]
  %s4 = inlined_call_operand.hbm [shape: f32[256,128], index: 4, kind: output, shape index: {}]
  %s5 = sld [smem:[#allocation0]]
  $region65: #{tpu_custom_call.1} parent=0
    _
  %s7 = ssub.s32 1, %s5
  %s8 = scalar_select 0, %s7, %s5
  %s10 = sshll.u32 %s0, 4
  %s11 = int_to_ptr.hbm [resolvable:$true] %s10
  %13 = dma.hbm_to_smem %s11, 16, [#allocation4], [#allocation3]
  %s15 = sshll.u32 %s1, 4
  %s16 = int_to_ptr.hbm [resolvable:$true] %s15
  %18 = dma.hbm_to_smem %s16, 16, [#allocation5], [#allocation3]
  %20 = dma.done [#allocation3], 32
  %21 = sfence
  $region1: #{tpu_custom_call.1} parent=0
    #allocation6 [shape = 'u8[131072]{0}', space=vmem, size = 0x20000, scoped, tag = 'input window, operand 2']
    #allocation7 [shape = 's32[2]{0}', space=sflag, size = 0x8, scoped, tag = 'scoped memory for tpu_custom_call.1']
    #allocation8 [shape = 's32[2]{0}', space=sflag, size = 0x8, scoped, tag = 'scoped memory for tpu_custom_call.1']
    #allocation9 [shape = 'u8[131072]{0}', space=vmem, size = 0x20000, scoped, tag = 'input window, operand 3, single buffered']
    #allocation10 [shape = 's32[1]{0}', space=sflag, size = 0x4, scoped, tag = 'scoped memory for tpu_custom_call.1']
    #allocation11 [shape = 'u8[131072]{0}', space=vmem, size = 0x20000, scoped, tag = 'output window, operand 0']
    %22 = vsyncpa [#allocation7], 0
    %s23 = scalar_lea.sflag [#allocation7], 1
    %24 = vsyncpa %s23, 0
    %25 = vsyncpa [#allocation10], 0
    %26 = vsyncpa [#allocation8], 0
    %s27 = scalar_lea.sflag [#allocation8], 1
    %28 = vsyncpa %s27, 0
    loop: start=0, step=1, limit=14
    $region2: #{tpu_custom_call.1} parent=1 // loop_pre_header
      _
    $region3: #{tpu_custom_call.1} parent=1 // loop_header
      %s30 = sphi 0, %s34
      %p31 = scmp.ge.s32.totalorder %s30, 14
      %s37 = sphi 0, %s56
      %s38 = sphi 0, %s52
      %s39 = sphi 0, %s48
      %s40 = sphi 0, %s37
      %s41 = sphi 0, %s38
      %s42 = sphi 0, %s39
      %s43 = sphi 0, %s40
      %s44 = sphi 0, %s41
      %s45 = sphi 0, %s42
      %s73 = sphi 0, %s75
      %s76 = sphi 0, %s73
      %s77 = sphi 0, %s76
      %s93 = sphi 0, %s77
      %s97 = sphi 0, %s97
      %s99 = sphi 0, %s97
      %s100 = sphi 0, %s99
      %s114 = sphi 0, %s100
      %s120 = sphi 0, %s122
      %s123 = sphi 0, %s120
      %s124 = sphi 0, %s123
      %s140 = sphi 0, %s124
    $region4: #{tpu_custom_call.1} parent=1 // loop_header_branch
      %33 = sbr.rel (%p31) target = $region8
    $region5: #{tpu_custom_call.1} parent=1 // loop_body
      %s35 = ssub.s32 %s30, 1
      %s36 = ssub.s32 %s30, 2
      %s46 = sadd.s32 1, %s39
      %p47 = scmp.ge.s32.totalorder %s46, 2
      %s48 = scalar_select %p47, 0, %s46
      %s49 = sadd.s32 1, %s38
      %s50 = scalar_select %p47, %s49, %s38
      %p51 = scmp.ge.s32.totalorder %s50, 3
      %s52 = scalar_select %p51, 0, %s50
      %s53 = sadd.s32 1, %s37
      %s54 = scalar_select %p51, %s53, %s37
      %p55 = scmp.ge.s32.totalorder %s54, 2
      %s56 = scalar_select %p55, 0, %s54
      %s57 = smul.u32 %s37, 3
      %s58 = sadd.s32 %s57, %s38
      %s59 = smul.u32 %s58, 2
      %s60 = sadd.s32 %s59, %s39
      %s61 = sld [smem:[#allocation4 + %s60]]
      %s62 = smul.u32 %s56, 3
      %s63 = sadd.s32 %s62, %s52
      %s64 = smul.u32 %s63, 2
      %s65 = sadd.s32 %s64, %s48
      %s66 = sld [smem:[#allocation4 + %s65]]
      %s67 = ssub.s32 %s38, %s52
      %s68 = ssub.s32 %s37, %s56
      %s69 = sor.u32 %s67, %s68
      %s70 = ssub.s32 %s61, %s66
      %s71 = sor.u32 %s69, %s70
      %p72 = scmp.eq.s32.totalorder %s71, 0
      %s74 = sadd.s32 %s73, 1
      %s75 = scalar_select %p72, %s73, %s74
      %p78 = pneg %p72
      %p79 = scmp.eq.s32.totalorder %s30, 11
      %p80 = por %p78, %p79
      %p81 = scmp.ne.s32.totalorder %s73, %s76
      %p82 = scmp.eq.s32.totalorder %s30, 0
      %p83 = por %p81, %p82
      %p84 = scmp.ne.s32.totalorder %s73, %s76
      %p85 = scmp.eq.s32.totalorder %s35, 11
      %p86 = por %p84, %p85
      %p87 = scmp.ne.s32.totalorder %s76, %s77
      %p88 = scmp.eq.s32.totalorder %s35, 0
      %p89 = por %p87, %p88
      %p90 = scmp.ne.s32.totalorder %s76, %s77
      %p91 = scmp.eq.s32.totalorder %s36, 11
      %p92 = por %p90, %p91
      %p94 = scmp.ne.s32.totalorder %s77, %s93
      %p95 = scmp.eq.s32.totalorder %s36, 0
      %p96 = por %p94, %p95
      %s98 = sadd.s32 %s97, 1
      %p101 = scmp.eq.s32.totalorder %s30, 11
      %p102 = scmp.ne.s32.totalorder %s97, %s99
      %p103 = scmp.eq.s32.totalorder %s30, 0
      %p104 = por %p102, %p103
      %p105 = scmp.ne.s32.totalorder %s97, %s99
      %p106 = scmp.eq.s32.totalorder %s35, 11
      %p107 = por %p105, %p106
      %p108 = scmp.ne.s32.totalorder %s99, %s100
      %p109 = scmp.eq.s32.totalorder %s35, 0
      %p110 = por %p108, %p109
      %p111 = scmp.ne.s32.totalorder %s99, %s100
      %p112 = scmp.eq.s32.totalorder %s36, 11
      %p113 = por %p111, %p112
      %p115 = scmp.ne.s32.totalorder %s100, %s114
      %p116 = scmp.eq.s32.totalorder %s36, 0
      %p117 = por %p115, %p116
      %s118 = ssub.s32 %s37, %s56
      %p119 = scmp.eq.s32.totalorder %s118, 0
      %s121 = sadd.s32 %s120, 1
      %s122 = scalar_select %p119, %s120, %s121
      %p125 = pneg %p119
      %p126 = scmp.eq.s32.totalorder %s30, 11
      %p127 = por %p125, %p126
      %p128 = scmp.ne.s32.totalorder %s120, %s123
      %p129 = scmp.eq.s32.totalorder %s30, 0
      %p130 = por %p128, %p129
      %p131 = scmp.ne.s32.totalorder %s120, %s123
      %p132 = scmp.eq.s32.totalorder %s35, 11
      %p133 = por %p131, %p132
      %p134 = scmp.ne.s32.totalorder %s123, %s124
      %p135 = scmp.eq.s32.totalorder %s35, 0
      %p136 = por %p134, %p135
      %p137 = scmp.ne.s32.totalorder %s123, %s124
      %p138 = scmp.eq.s32.totalorder %s36, 11
      %p139 = por %p137, %p138
      %p141 = scmp.ne.s32.totalorder %s124, %s140
      %p142 = scmp.eq.s32.totalorder %s36, 0
      %p143 = por %p141, %p142
      %p144 = scmp.le.s32.totalorder 1, %s30
      %p145 = scmp.lt.s32.totalorder %s30, 13
      %p146 = pnand %p144, %p145
      %p147 = pneg %p146
      // Predicated region
      $region9: #{tpu_custom_call.1} parent=5 // pred_check
        _
      $region10: #{tpu_custom_call.1} parent=5 // pred_check_branch
        %149 = sbr.rel (%p146) target = $region12
      $region11: #{tpu_custom_call.1} parent=5 // pred_region
        %s150 = ssub.s32 %s30, 1
        // Predicated region
        $region13: #{tpu_custom_call.1} parent=11 // pred_check
          %p151 = pneg %p110
        $region14: #{tpu_custom_call.1} parent=11 // pred_check_branch
          %153 = sbr.rel (%p151) target = $region16
        $region15: #{tpu_custom_call.1} parent=11 // pred_region
          %155 = vsyncadd [#allocation10], 0
          %s156 = sshll.u32 %s3, 4
          %s157 = int_to_ptr.hbm [resolvable:$true] %s156
          %s158 = sshll.u32 [#allocation9], 4
          %s159 = int_to_ptr.vmem [resolvable:$true] %s158
          %164 = dma.hbm_to_vmem [thread:$0]  %s157, 4096, %s159, [#allocation10], 128, 128, 8
        $region16: #{tpu_custom_call.1} parent=11 // pred_fallthru
          _
      $region12: #{tpu_custom_call.1} parent=5 // pred_fallthru
        _
      %p165 = scmp.lt.s32.totalorder %s30, 12
      // Predicated region
      $region17: #{tpu_custom_call.1} parent=5 // pred_check
        %p166 = pneg %p165
      $region18: #{tpu_custom_call.1} parent=5 // pred_check_branch
        %168 = sbr.rel (%p166) target = $region20
      $region19: #{tpu_custom_call.1} parent=5 // pred_region
        // Predicated region
        $region21: #{tpu_custom_call.1} parent=19 // pred_check
          %p169 = pneg %p83
        $region22: #{tpu_custom_call.1} parent=19 // pred_check_branch
          %171 = sbr.rel (%p169) target = $region24
        $region23: #{tpu_custom_call.1} parent=19 // pred_region
          %s172 = sand.u32 %s73, 1
          %s173 = scalar_lea.sflag [#allocation7], %s172
          %s174 = sand.u32 %s73, 1
          %s175 = smul.addr %s174, 128
          %s176 = scalar_lea.vmem [#allocation6], %s175
          %s177 = smul.u32 %s37, 3
          %s178 = sadd.s32 %s177, %s38
          %s179 = smul.u32 %s178, 2
          %s180 = sadd.s32 %s179, %s39
          %s181 = sld [smem:[#allocation4 + %s180]]
          %s182 = smul.u32 16, %s37
          %184 = vsyncadd %s173, 0
          %s185 = smul.addr %s182, 2
          %s186 = sadd.s32 %s181, %s185
          %s187 = smul.addr %s38, 64
          %s188 = sadd.s32 %s186, %s187
          %s189 = smul.addr %s188, 8
          %s190 = scalar_lea.hbm %s2, %s189
          %s191 = sshll.u32 %s190, 4
          %s192 = int_to_ptr.hbm [resolvable:$true] %s191
          %s193 = sshll.u32 %s176, 4
          %s194 = int_to_ptr.vmem [resolvable:$true] %s193
          %199 = dma.hbm_to_vmem [thread:$0]  %s192, 2048, %s194, %s173, 256, 128, 8
        $region24: #{tpu_custom_call.1} parent=19 // pred_fallthru
          _
      $region20: #{tpu_custom_call.1} parent=5 // pred_fallthru
        _
      %p200 = scmp.le.s32.totalorder 1, %s30
      %p201 = scmp.lt.s32.totalorder %s30, 13
      %p202 = pnand %p200, %p201
      %p203 = pneg %p202
      // Predicated region
      $region25: #{tpu_custom_call.1} parent=5 // pred_check
        _
      $region26: #{tpu_custom_call.1} parent=5 // pred_check_branch
        %205 = sbr.rel (%p202) target = $region28
      $region27: #{tpu_custom_call.1} parent=5 // pred_region
        %s206 = ssub.s32 %s30, 1
        %s207 = sand.u32 %s76, 1
        %s208 = scalar_lea.sflag [#allocation7], %s207
        %s209 = sand.u32 %s76, 1
        %s210 = smul.addr %s209, 128
        %s211 = scalar_lea.vmem [#allocation6], %s210
        // Predicated region
        $region29: #{tpu_custom_call.1} parent=27 // pred_check
          %p212 = pneg %p89
        $region30: #{tpu_custom_call.1} parent=27 // pred_check_branch
          %214 = sbr.rel (%p212) target = $region32
        $region31: #{tpu_custom_call.1} parent=27 // pred_region
          %216 = dma.done %s208, 2048
        $region32: #{tpu_custom_call.1} parent=27 // pred_fallthru
          _
        // Predicated region
        $region33: #{tpu_custom_call.1} parent=27 // pred_check
          %p217 = pneg %p110
        $region34: #{tpu_custom_call.1} parent=27 // pred_check_branch
          %219 = sbr.rel (%p217) target = $region36
        $region35: #{tpu_custom_call.1} parent=27 // pred_region
          %221 = dma.done [#allocation10], 4096
        $region36: #{tpu_custom_call.1} parent=27 // pred_fallthru
          _
        %s222 = sand.u32 %s76, 1
        %s223 = scalar_lea.sflag [#allocation7], %s222
        %s224 = sand.u32 %s76, 1
        %s225 = smul.addr %s224, 128
        %s226 = scalar_lea.vmem [#allocation6], %s225
        %p227 = pneg %p89
        %p228 = pneg %p86
        %p229 = pneg %p110
        %p230 = pneg %p107
        %p231 = pneg %p136
        %p232 = pneg %p133
        %s233 = sand.u32 %s123, 1
        %s234 = scalar_lea.sflag [#allocation8], %s233
        %s235 = sand.u32 %s123, 1
        %s236 = smul.addr %s235, 128
        %s237 = scalar_lea.vmem [#allocation11], %s236
        %s238 = smul.u32 %s40, 3
        %s239 = sadd.s32 %s238, %s41
        %s240 = smul.u32 %s239, 2
        %s241 = sadd.s32 %s240, %s42
        %s242 = sld [smem:[#allocation4 + %s241]]
        %s243 = smul.u32 16, %s40
        %s244 = smul.u32 16, %s40
        %p245 = scmp.eq.s32.totalorder %s41, 0
        %p246 = scmp.eq.s32.totalorder %s42, 0
        %p247 = pnand %p245, %p246
        %p248 = pneg %p247
        // Predicated region
        $region37: #{tpu_custom_call.1} parent=27 // pred_check
          _
        $region38: #{tpu_custom_call.1} parent=27 // pred_check_branch
          %250 = sbr.rel (%p247) target = $region40
        $region39: #{tpu_custom_call.1} parent=27 // pred_region
          %251 = vst [vmem:[%s237] sm:$0xff] 0.0
          %252 = vst [vmem:[%s237 + $0x8] sm:$0xff] 0.0
          %253 = vst [vmem:[%s237 + $0x10] sm:$0xff] 0.0
          %254 = vst [vmem:[%s237 + $0x18] sm:$0xff] 0.0
          %255 = vst [vmem:[%s237 + $0x20] sm:$0xff] 0.0
          %256 = vst [vmem:[%s237 + $0x28] sm:$0xff] 0.0
          %257 = vst [vmem:[%s237 + $0x30] sm:$0xff] 0.0
          %258 = vst [vmem:[%s237 + $0x38] sm:$0xff] 0.0
          %259 = vst [vmem:[%s237 + $0x40] sm:$0xff] 0.0
          %260 = vst [vmem:[%s237 + $0x48] sm:$0xff] 0.0
          %261 = vst [vmem:[%s237 + $0x50] sm:$0xff] 0.0
          %262 = vst [vmem:[%s237 + $0x58] sm:$0xff] 0.0
          %263 = vst [vmem:[%s237 + $0x60] sm:$0xff] 0.0
          %264 = vst [vmem:[%s237 + $0x68] sm:$0xff] 0.0
          %265 = vst [vmem:[%s237 + $0x70] sm:$0xff] 0.0
          %266 = vst [vmem:[%s237 + $0x78] sm:$0xff] 0.0
        $region40: #{tpu_custom_call.1} parent=27 // pred_fallthru
          _
        // Predicated region
        $region41: #{tpu_custom_call.1} parent=27 // pred_check
          %p267 = pneg %p246
        $region42: #{tpu_custom_call.1} parent=27 // pred_check_branch
          %269 = sbr.rel (%p267) target = $region44
        $region43: #{tpu_custom_call.1} parent=27 // pred_region
          %270 = vst [vmem:[#allocation2] sm:$0xff] 0.0
          %271 = vst [vmem:[#allocation2 + $0x8] sm:$0xff] 0.0
          %272 = vst [vmem:[#allocation2 + $0x10] sm:$0xff] 0.0
          %273 = vst [vmem:[#allocation2 + $0x18] sm:$0xff] 0.0
          %274 = vst [vmem:[#allocation2 + $0x20] sm:$0xff] 0.0
          %275 = vst [vmem:[#allocation2 + $0x28] sm:$0xff] 0.0
          %276 = vst [vmem:[#allocation2 + $0x30] sm:$0xff] 0.0
          %277 = vst [vmem:[#allocation2 + $0x38] sm:$0xff] 0.0
          %278 = vst [vmem:[#allocation2 + $0x40] sm:$0xff] 0.0
          %279 = vst [vmem:[#allocation2 + $0x48] sm:$0xff] 0.0
          %280 = vst [vmem:[#allocation2 + $0x50] sm:$0xff] 0.0
          %281 = vst [vmem:[#allocation2 + $0x58] sm:$0xff] 0.0
          %282 = vst [vmem:[#allocation2 + $0x60] sm:$0xff] 0.0
          %283 = vst [vmem:[#allocation2 + $0x68] sm:$0xff] 0.0
          %284 = vst [vmem:[#allocation2 + $0x70] sm:$0xff] 0.0
          %285 = vst [vmem:[#allocation2 + $0x78] sm:$0xff] 0.0
        $region44: #{tpu_custom_call.1} parent=27 // pred_fallthru
          _
        %s286 = smul.u32 %s40, 3
        %s287 = sadd.s32 %s286, %s41
        %s288 = sld [smem:[#allocation5 + %s287]]
        %p289 = scmp.lt.s32.totalorder %s42, %s288
        // Predicated region
        $region45: #{tpu_custom_call.1} parent=27 // pred_check
          %p290 = pneg %p289
        $region46: #{tpu_custom_call.1} parent=27 // pred_check_branch
          %292 = sbr.rel (%p290) target = $region48
        $region47: #{tpu_custom_call.1} parent=27 // pred_region
          %s293 = smul.u32 %s287, 2
          %s294 = sadd.s32 %s293, %s42
          %s295 = sld [smem:[#allocation4 + %s294]]
          %s296 = smul.u32 %s295, 128
          %s297 = scalar_lea.vmem [#allocation9], %s296
          %v298 = vld [vmem:[%s297] sm:$0xff]
          %v299 = vld [vmem:[%s297 + $0x8] sm:$0xff]
          %v300 = vld [vmem:[%s297 + $0x10] sm:$0xff]
          %v301 = vld [vmem:[%s297 + $0x18] sm:$0xff]
          %v302 = vld [vmem:[%s297 + $0x20] sm:$0xff]
          %v303 = vld [vmem:[%s297 + $0x28] sm:$0xff]
          %v304 = vld [vmem:[%s297 + $0x30] sm:$0xff]
          %v305 = vld [vmem:[%s297 + $0x38] sm:$0xff]
          %v306 = vld [vmem:[%s297 + $0x40] sm:$0xff]
          %v307 = vld [vmem:[%s297 + $0x48] sm:$0xff]
          %v308 = vld [vmem:[%s297 + $0x50] sm:$0xff]
          %v309 = vld [vmem:[%s297 + $0x58] sm:$0xff]
          %v310 = vld [vmem:[%s297 + $0x60] sm:$0xff]
          %v311 = vld [vmem:[%s297 + $0x68] sm:$0xff]
          %v312 = vld [vmem:[%s297 + $0x70] sm:$0xff]
          %v313 = vld [vmem:[%s297 + $0x78] sm:$0xff]
          %v314 = vld [vmem:[#allocation2] sm:$0xff]
          %v315 = vld [vmem:[#allocation2 + $0x8] sm:$0xff]
          %v316 = vld [vmem:[#allocation2 + $0x10] sm:$0xff]
          %v317 = vld [vmem:[#allocation2 + $0x18] sm:$0xff]
          %v318 = vld [vmem:[#allocation2 + $0x20] sm:$0xff]
          %v319 = vld [vmem:[#allocation2 + $0x28] sm:$0xff]
          %v320 = vld [vmem:[#allocation2 + $0x30] sm:$0xff]
          %v321 = vld [vmem:[#allocation2 + $0x38] sm:$0xff]
          %v322 = vld [vmem:[#allocation2 + $0x40] sm:$0xff]
          %v323 = vld [vmem:[#allocation2 + $0x48] sm:$0xff]
          %v324 = vld [vmem:[#allocation2 + $0x50] sm:$0xff]
          %v325 = vld [vmem:[#allocation2 + $0x58] sm:$0xff]
          %v326 = vld [vmem:[#allocation2 + $0x60] sm:$0xff]
          %v327 = vld [vmem:[#allocation2 + $0x68] sm:$0xff]
          %v328 = vld [vmem:[#allocation2 + $0x70] sm:$0xff]
          %v329 = vld [vmem:[#allocation2 + $0x78] sm:$0xff]
          %v330 = vld [vmem:[%s211] sm:$0xff]
          %v331 = vld [vmem:[%s211 + $0x8] sm:$0xff]
          %v332 = vld [vmem:[%s211 + $0x10] sm:$0xff]
          %v333 = vld [vmem:[%s211 + $0x18] sm:$0xff]
          %v334 = vld [vmem:[%s211 + $0x20] sm:$0xff]
          %v335 = vld [vmem:[%s211 + $0x28] sm:$0xff]
          %v336 = vld [vmem:[%s211 + $0x30] sm:$0xff]
          %v337 = vld [vmem:[%s211 + $0x38] sm:$0xff]
          %v338 = vld [vmem:[%s211 + $0x40] sm:$0xff]
          %v339 = vld [vmem:[%s211 + $0x48] sm:$0xff]
          %v340 = vld [vmem:[%s211 + $0x50] sm:$0xff]
          %v341 = vld [vmem:[%s211 + $0x58] sm:$0xff]
          %v342 = vld [vmem:[%s211 + $0x60] sm:$0xff]
          %v343 = vld [vmem:[%s211 + $0x68] sm:$0xff]
          %v344 = vld [vmem:[%s211 + $0x70] sm:$0xff]
          %v345 = vld [vmem:[%s211 + $0x78] sm:$0xff]
          %346 = vmatpush.msra.mxu0 %v313
          %347 = vmatpush.msra.mxu0 %v312
          %348 = vmatpush.msra.mxu0 %v311
          %349 = vmatpush.msra.mxu0 %v310
          %350 = vmatpush.msra.mxu0 %v309
          %351 = vmatpush.msra.mxu0 %v308
          %352 = vmatpush.msra.mxu0 %v307
          %353 = vmatpush.msra.mxu0 %v306
          %354 = vmatpush.msra.mxu0 %v305
          %355 = vmatpush.msra.mxu0 %v304
          %356 = vmatpush.msra.mxu0 %v303
          %357 = vmatpush.msra.mxu0 %v302
          %358 = vmatpush.msra.mxu0 %v301
          %359 = vmatpush.msra.mxu0 %v300
          %360 = vmatpush.msra.mxu0 %v299
          %361 = vmatpush.msra.mxu0 %v298
          %362 = vmatmul.f32.gmra.mxu0 %v330
          %v363 = vpop.f32.mrf.mxu0
          %v364 = vadd.f32 0.0, %v363
          %365 = vmatmul.f32.gmra.mxu0 %v331
          %v366 = vpop.f32.mrf.mxu0
          %v367 = vadd.f32 0.0, %v366
          %368 = vmatmul.f32.gmra.mxu0 %v332
          %v369 = vpop.f32.mrf.mxu0
          %v370 = vadd.f32 0.0, %v369
          %371 = vmatmul.f32.gmra.mxu0 %v333
          %v372 = vpop.f32.mrf.mxu0
          %v373 = vadd.f32 0.0, %v372
          %374 = vmatmul.f32.gmra.mxu0 %v334
          %v375 = vpop.f32.mrf.mxu0
          %v376 = vadd.f32 0.0, %v375
          %377 = vmatmul.f32.gmra.mxu0 %v335
          %v378 = vpop.f32.mrf.mxu0
          %v379 = vadd.f32 0.0, %v378
          %380 = vmatmul.f32.gmra.mxu0 %v336
          %v381 = vpop.f32.mrf.mxu0
          %v382 = vadd.f32 0.0, %v381
          %383 = vmatmul.f32.gmra.mxu0 %v337
          %v384 = vpop.f32.mrf.mxu0
          %v385 = vadd.f32 0.0, %v384
          %386 = vmatmul.f32.gmra.mxu0 %v338
          %v387 = vpop.f32.mrf.mxu0
          %v388 = vadd.f32 0.0, %v387
          %389 = vmatmul.f32.gmra.mxu0 %v339
          %v390 = vpop.f32.mrf.mxu0
          %v391 = vadd.f32 0.0, %v390
          %392 = vmatmul.f32.gmra.mxu0 %v340
          %v393 = vpop.f32.mrf.mxu0
          %v394 = vadd.f32 0.0, %v393
          %395 = vmatmul.f32.gmra.mxu0 %v341
          %v396 = vpop.f32.mrf.mxu0
          %v397 = vadd.f32 0.0, %v396
          %398 = vmatmul.f32.gmra.mxu0 %v342
          %v399 = vpop.f32.mrf.mxu0
          %v400 = vadd.f32 0.0, %v399
          %401 = vmatmul.f32.gmra.mxu0 %v343
          %v402 = vpop.f32.mrf.mxu0
          %v403 = vadd.f32 0.0, %v402
          %404 = vmatmul.f32.gmra.mxu0 %v344
          %v405 = vpop.f32.mrf.mxu0
          %v406 = vadd.f32 0.0, %v405
          %407 = vmatmul.f32.gmra.mxu0 %v345
          %v408 = vpop.f32.mrf.mxu0
          %v409 = vadd.f32 0.0, %v408
          %410 = vdwg.mxu0
          %v411 = vadd.f32 %v314, %v364
          %v412 = vadd.f32 %v315, %v367
          %v413 = vadd.f32 %v316, %v370
          %v414 = vadd.f32 %v317, %v373
          %v415 = vadd.f32 %v318, %v376
          %v416 = vadd.f32 %v319, %v379
          %v417 = vadd.f32 %v320, %v382
          %v418 = vadd.f32 %v321, %v385
          %v419 = vadd.f32 %v322, %v388
          %v420 = vadd.f32 %v323, %v391
          %v421 = vadd.f32 %v324, %v394
          %v422 = vadd.f32 %v325, %v397
          %v423 = vadd.f32 %v326, %v400
          %v424 = vadd.f32 %v327, %v403
          %v425 = vadd.f32 %v328, %v406
          %v426 = vadd.f32 %v329, %v409
          %427 = vst [vmem:[#allocation2] sm:$0xff] %v411
          %428 = vst [vmem:[#allocation2 + $0x8] sm:$0xff] %v412
          %429 = vst [vmem:[#allocation2 + $0x10] sm:$0xff] %v413
          %430 = vst [vmem:[#allocation2 + $0x18] sm:$0xff] %v414
          %431 = vst [vmem:[#allocation2 + $0x20] sm:$0xff] %v415
          %432 = vst [vmem:[#allocation2 + $0x28] sm:$0xff] %v416
          %433 = vst [vmem:[#allocation2 + $0x30] sm:$0xff] %v417
          %434 = vst [vmem:[#allocation2 + $0x38] sm:$0xff] %v418
          %435 = vst [vmem:[#allocation2 + $0x40] sm:$0xff] %v419
          %436 = vst [vmem:[#allocation2 + $0x48] sm:$0xff] %v420
          %437 = vst [vmem:[#allocation2 + $0x50] sm:$0xff] %v421
          %438 = vst [vmem:[#allocation2 + $0x58] sm:$0xff] %v422
          %439 = vst [vmem:[#allocation2 + $0x60] sm:$0xff] %v423
          %440 = vst [vmem:[#allocation2 + $0x68] sm:$0xff] %v424
          %441 = vst [vmem:[#allocation2 + $0x70] sm:$0xff] %v425
          %442 = vst [vmem:[#allocation2 + $0x78] sm:$0xff] %v426
        $region48: #{tpu_custom_call.1} parent=27 // pred_fallthru
          _
        %p443 = scmp.eq.s32.totalorder %s42, 1
        // Predicated region
        $region49: #{tpu_custom_call.1} parent=27 // pred_check
          %p444 = pneg %p443
        $region50: #{tpu_custom_call.1} parent=27 // pred_check_branch
          %446 = sbr.rel (%p444) target = $region52
        $region51: #{tpu_custom_call.1} parent=27 // pred_region
          %v447 = vld [vmem:[#allocation2] sm:$0xff]
          %v448 = vld [vmem:[#allocation2 + $0x8] sm:$0xff]
          %v449 = vld [vmem:[#allocation2 + $0x10] sm:$0xff]
          %v450 = vld [vmem:[#allocation2 + $0x18] sm:$0xff]
          %v451 = vld [vmem:[#allocation2 + $0x20] sm:$0xff]
          %v452 = vld [vmem:[#allocation2 + $0x28] sm:$0xff]
          %v453 = vld [vmem:[#allocation2 + $0x30] sm:$0xff]
          %v454 = vld [vmem:[#allocation2 + $0x38] sm:$0xff]
          %v455 = vld [vmem:[#allocation2 + $0x40] sm:$0xff]
          %v456 = vld [vmem:[#allocation2 + $0x48] sm:$0xff]
          %v457 = vld [vmem:[#allocation2 + $0x50] sm:$0xff]
          %v458 = vld [vmem:[#allocation2 + $0x58] sm:$0xff]
          %v459 = vld [vmem:[#allocation2 + $0x60] sm:$0xff]
          %v460 = vld [vmem:[#allocation2 + $0x68] sm:$0xff]
          %v461 = vld [vmem:[#allocation2 + $0x70] sm:$0xff]
          %v462 = vld [vmem:[#allocation2 + $0x78] sm:$0xff]
          %v463 = vld [vmem:[%s237] sm:$0xff]
          %v464 = vld [vmem:[%s237 + $0x8] sm:$0xff]
          %v465 = vld [vmem:[%s237 + $0x10] sm:$0xff]
          %v466 = vld [vmem:[%s237 + $0x18] sm:$0xff]
          %v467 = vld [vmem:[%s237 + $0x20] sm:$0xff]
          %v468 = vld [vmem:[%s237 + $0x28] sm:$0xff]
          %v469 = vld [vmem:[%s237 + $0x30] sm:$0xff]
          %v470 = vld [vmem:[%s237 + $0x38] sm:$0xff]
          %v471 = vld [vmem:[%s237 + $0x40] sm:$0xff]
          %v472 = vld [vmem:[%s237 + $0x48] sm:$0xff]
          %v473 = vld [vmem:[%s237 + $0x50] sm:$0xff]
          %v474 = vld [vmem:[%s237 + $0x58] sm:$0xff]
          %v475 = vld [vmem:[%s237 + $0x60] sm:$0xff]
          %v476 = vld [vmem:[%s237 + $0x68] sm:$0xff]
          %v477 = vld [vmem:[%s237 + $0x70] sm:$0xff]
          %v478 = vld [vmem:[%s237 + $0x78] sm:$0xff]
          %vm479 = vcmp.ge.f32.partialorder %v447, 0.0
          %vm480 = vcmp.ge.f32.partialorder %v448, 0.0
          %vm481 = vcmp.ge.f32.partialorder %v449, 0.0
          %vm482 = vcmp.ge.f32.partialorder %v450, 0.0
          %vm483 = vcmp.ge.f32.partialorder %v451, 0.0
          %vm484 = vcmp.ge.f32.partialorder %v452, 0.0
          %vm485 = vcmp.ge.f32.partialorder %v453, 0.0
          %vm486 = vcmp.ge.f32.partialorder %v454, 0.0
          %vm487 = vcmp.ge.f32.partialorder %v455, 0.0
          %vm488 = vcmp.ge.f32.partialorder %v456, 0.0
          %vm489 = vcmp.ge.f32.partialorder %v457, 0.0
          %vm490 = vcmp.ge.f32.partialorder %v458, 0.0
          %vm491 = vcmp.ge.f32.partialorder %v459, 0.0
          %vm492 = vcmp.ge.f32.partialorder %v460, 0.0
          %vm493 = vcmp.ge.f32.partialorder %v461, 0.0
          %vm494 = vcmp.ge.f32.partialorder %v462, 0.0
          %v495 = vmul.f32 %v447, 0.01
          %v496 = vmul.f32 %v448, 0.01
          %v497 = vmul.f32 %v449, 0.01
          %v498 = vmul.f32 %v450, 0.01
          %v499 = vmul.f32 %v451, 0.01
          %v500 = vmul.f32 %v452, 0.01
          %v501 = vmul.f32 %v453, 0.01
          %v502 = vmul.f32 %v454, 0.01
          %v503 = vmul.f32 %v455, 0.01
          %v504 = vmul.f32 %v456, 0.01
          %v505 = vmul.f32 %v457, 0.01
          %v506 = vmul.f32 %v458, 0.01
          %v507 = vmul.f32 %v459, 0.01
          %v508 = vmul.f32 %v460, 0.01
          %v509 = vmul.f32 %v461, 0.01
          %v510 = vmul.f32 %v462, 0.01
          %v511 = vsel %vm479, %v447, %v495
          %v512 = vsel %vm480, %v448, %v496
          %v513 = vsel %vm481, %v449, %v497
          %v514 = vsel %vm482, %v450, %v498
          %v515 = vsel %vm483, %v451, %v499
          %v516 = vsel %vm484, %v452, %v500
          %v517 = vsel %vm485, %v453, %v501
          %v518 = vsel %vm486, %v454, %v502
          %v519 = vsel %vm487, %v455, %v503
          %v520 = vsel %vm488, %v456, %v504
          %v521 = vsel %vm489, %v457, %v505
          %v522 = vsel %vm490, %v458, %v506
          %v523 = vsel %vm491, %v459, %v507
          %v524 = vsel %vm492, %v460, %v508
          %v525 = vsel %vm493, %v461, %v509
          %v526 = vsel %vm494, %v462, %v510
          %v527 = vadd.f32 %v463, %v511
          %v528 = vadd.f32 %v464, %v512
          %v529 = vadd.f32 %v465, %v513
          %v530 = vadd.f32 %v466, %v514
          %v531 = vadd.f32 %v467, %v515
          %v532 = vadd.f32 %v468, %v516
          %v533 = vadd.f32 %v469, %v517
          %v534 = vadd.f32 %v470, %v518
          %v535 = vadd.f32 %v471, %v519
          %v536 = vadd.f32 %v472, %v520
          %v537 = vadd.f32 %v473, %v521
          %v538 = vadd.f32 %v474, %v522
          %v539 = vadd.f32 %v475, %v523
          %v540 = vadd.f32 %v476, %v524
          %v541 = vadd.f32 %v477, %v525
          %v542 = vadd.f32 %v478, %v526
          %543 = vst [vmem:[%s237] sm:$0xff] %v527
          %544 = vst [vmem:[%s237 + $0x8] sm:$0xff] %v528
          %545 = vst [vmem:[%s237 + $0x10] sm:$0xff] %v529
          %546 = vst [vmem:[%s237 + $0x18] sm:$0xff] %v530
          %547 = vst [vmem:[%s237 + $0x20] sm:$0xff] %v531
          %548 = vst [vmem:[%s237 + $0x28] sm:$0xff] %v532
          %549 = vst [vmem:[%s237 + $0x30] sm:$0xff] %v533
          %550 = vst [vmem:[%s237 + $0x38] sm:$0xff] %v534
          %551 = vst [vmem:[%s237 + $0x40] sm:$0xff] %v535
          %552 = vst [vmem:[%s237 + $0x48] sm:$0xff] %v536
          %553 = vst [vmem:[%s237 + $0x50] sm:$0xff] %v537
          %554 = vst [vmem:[%s237 + $0x58] sm:$0xff] %v538
          %555 = vst [vmem:[%s237 + $0x60] sm:$0xff] %v539
          %556 = vst [vmem:[%s237 + $0x68] sm:$0xff] %v540
          %557 = vst [vmem:[%s237 + $0x70] sm:$0xff] %v541
          %558 = vst [vmem:[%s237 + $0x78] sm:$0xff] %v542
        $region52: #{tpu_custom_call.1} parent=27 // pred_fallthru
          _
        %s559 = sand.u32 %s123, 1
        %s560 = scalar_lea.sflag [#allocation8], %s559
        %s561 = sand.u32 %s123, 1
        %s562 = smul.addr %s561, 128
        %s563 = scalar_lea.vmem [#allocation11], %s562
        // Predicated region
        $region53: #{tpu_custom_call.1} parent=27 // pred_check
          %p564 = pneg %p133
        $region54: #{tpu_custom_call.1} parent=27 // pred_check_branch
          %566 = sbr.rel (%p564) target = $region56
        $region55: #{tpu_custom_call.1} parent=27 // pred_region
          %s567 = smul.u32 16, %s40
          %569 = vsyncadd %s560, 0
          %s570 = smul.addr %s567, 8
          %s571 = scalar_lea.hbm %s4, %s570
          %s572 = sshll.u32 %s563, 4
          %s573 = int_to_ptr.vmem [resolvable:$true] %s572
          %s574 = sshll.u32 %s571, 4
          %s575 = int_to_ptr.hbm [resolvable:$true] %s574
          %580 = dma.vmem_to_hbm [thread:$0]  %s573, 2048, %s575, %s560, 128, 128, 8
        $region56: #{tpu_custom_call.1} parent=27 // pred_fallthru
          _
      $region28: #{tpu_custom_call.1} parent=5 // pred_fallthru
        _
      %p581 = scmp.le.s32.totalorder 2, %s30
      // Predicated region
      $region57: #{tpu_custom_call.1} parent=5 // pred_check
        %p582 = pneg %p581
      $region58: #{tpu_custom_call.1} parent=5 // pred_check_branch
        %584 = sbr.rel (%p582) target = $region60
      $region59: #{tpu_custom_call.1} parent=5 // pred_region
        %s585 = ssub.s32 %s30, 2
        // Predicated region
        $region61: #{tpu_custom_call.1} parent=59 // pred_check
          %p586 = pneg %p139
        $region62: #{tpu_custom_call.1} parent=59 // pred_check_branch
          %588 = sbr.rel (%p586) target = $region64
        $region63: #{tpu_custom_call.1} parent=59 // pred_region
          %s589 = sand.u32 %s124, 1
          %s590 = scalar_lea.sflag [#allocation8], %s589
          %s591 = sand.u32 %s124, 1
          %s592 = smul.addr %s591, 128
          %s593 = scalar_lea.vmem [#allocation11], %s592
          %595 = dma.done %s590, 2048
        $region64: #{tpu_custom_call.1} parent=59 // pred_fallthru
          _
      $region60: #{tpu_custom_call.1} parent=5 // pred_fallthru
        _
    $region6: #{tpu_custom_call.1} parent=1 // loop_footer
      %s34 = sadd.s32 1, %s30
    $region7: #{tpu_custom_call.1} parent=1 // loop_footer_branch
      %29 = sbr.rel target = $region3
    $region8: #{tpu_custom_call.1} parent=1 // loop_exit
      _
    %596 = vsyncpa [#allocation7], 1
    %s597 = scalar_lea.sflag [#allocation7], 1
    %598 = vsyncpa %s597, 1
    %599 = vsyncpa [#allocation10], 1
    %600 = vsyncpa [#allocation8], 1
    %s601 = scalar_lea.sflag [#allocation8], 1
    %602 = vsyncpa %s601, 1

</llo_original>
